<compile_context>
chip_gen: v7x
topology: tpu7x:2x2x1
jax: 0.10.0
libtpu: 0.0.40
codegen_flags: <defaults>
</compile_context>

<pallas_src>
import jax
import jax.numpy as jnp
import numpy as np
from jax.experimental import pallas as pl
from jax.experimental.pallas import tpu as pltpu


def _metric_kernel(logits_ref, tgt_ref, pred_ref, label_ref, out_ref):
    # logits_ref : (C, tn)  model dtype (f32/bf16), classes on sublanes, rows on lanes
    # tgt_ref    : (1, tn)  int32 activity labels (0 = padding / ignore_index)
    # pred_ref   : (1, tn)  f32 ttne predictions
    # label_ref  : (1, tn)  f32 ttne labels (-100 = padding sentinel)
    # out_ref    : (2, tn)  f32, row 0 = cross-entropy, row 1 = |pred - label|
    logits = logits_ref[...].astype(jnp.float32)              # (C, tn)
    tgt = tgt_ref[...]                                        # (1, tn) i32

    # Numerically stable log-softmax cross-entropy: lse(x) - x[target].
    m = jnp.max(logits, axis=0, keepdims=True)                # (1, tn)
    lse = m + jnp.log(jnp.sum(jnp.exp(logits - m), axis=0, keepdims=True))

    # Gather the target logit via a one-hot compare (no dynamic gather on TPU).
    class_ids = jax.lax.broadcasted_iota(jnp.int32, logits.shape, 0)   # (C, tn)
    tgt_logit = jnp.sum(jnp.where(class_ids == tgt, logits, 0.0),
                        axis=0, keepdims=True)                # (1, tn)

    # ignore_index=0 -> zero loss (those rows are filtered out downstream).
    ce = jnp.where(tgt == 0, 0.0, lse - tgt_logit)            # (1, tn)
    ae = jnp.abs(pred_ref[...] - label_ref[...])              # (1, tn)

    # Two full-width lane-dense row stores (no in-register concat).
    out_ref[0:1, :] = ce
    out_ref[1:2, :] = ae


def _choose_tn(n_cols, num_classes, tn_max=32768, vmem_block_budget=8 * 1024 * 1024):
    """Pick the lane tile: multiple of 128, VMEM-budgeted, >= ~8 grid steps."""
    c = num_classes
    # Bytes of VMEM per lane column: double-buffered in/out blocks
    # (logits C rows + tgt/pred/label 3 rows + out 2 rows, f32-sized) plus
    # ~2 in-kernel f32 temporaries the size of the logits tile.
    bytes_per_col = 4 * (2 * (c + 5) + 2 * c)
    tn = min(tn_max, max(1, vmem_block_budget // bytes_per_col))
    tn = min(tn, pl.cdiv(n_cols, 8))        # keep >= ~8 steps for v7x 2-TC sharding
    tn = max(128, (tn // 128) * 128)        # whole 128-lane tiles
    return int(tn)


@jax.jit
def _dense_losses(act_logits, ttne_preds, ttne_labels, act_labels):
    """Returns per-position (ce, ae), each shape (N,), N = batch * window."""
    B, W, C = act_logits.shape
    N = B * W

    # Lane-dense layout: flattened rows on lanes, small class axis on sublanes.
    # This transpose is the only materialized copy in the wrapper (see header
    # note); every other input below is a free reshape / no-op cast.
    logits_t = jnp.transpose(act_logits.reshape(N, C))             # (C, N)
    tgt = act_labels.reshape(1, N).astype(jnp.int32)               # (1, N)
    pred = ttne_preds.reshape(1, N).astype(jnp.float32)            # (1, N)
    label = ttne_labels.reshape(1, N).astype(jnp.float32)          # (1, N)

    # Only pad when the whole problem is smaller than one 128-lane tile
    # (negligible copy); for N >= 128 the ragged tail is handled by Pallas'
    # partial edge blocks and sliced off below.
    n_cols = N
    if N < 128:
        pad = 128 - N
        logits_t = jnp.pad(logits_t, ((0, 0), (0, pad)))
        tgt = jnp.pad(tgt, ((0, 0), (0, pad)))                     # pad target = 0
        pred = jnp.pad(pred, ((0, 0), (0, pad)))
        label = jnp.pad(label, ((0, 0), (0, pad)))
        n_cols = 128

    tn = _choose_tn(n_cols, C)
    grid = (pl.cdiv(n_cols, tn),)

    out = pl.pallas_call(
        _metric_kernel,
        out_shape=jax.ShapeDtypeStruct((2, n_cols), jnp.float32),
        grid_spec=pltpu.PrefetchScalarGridSpec(
            num_scalar_prefetch=0,
            grid=grid,
            in_specs=[
                pl.BlockSpec((C, tn), lambda i: (0, i)),   # logits, lane-dense
                pl.BlockSpec((1, tn), lambda i: (0, i)),   # activity labels
                pl.BlockSpec((1, tn), lambda i: (0, i)),   # ttne predictions
                pl.BlockSpec((1, tn), lambda i: (0, i)),   # ttne labels
            ],
            out_specs=pl.BlockSpec((2, tn), lambda i: (0, i)),
        ),
        compiler_params=pltpu.CompilerParams(
            dimension_semantics=("parallel",),
            vmem_limit_bytes=32 * 1024 * 1024),
    )(logits_t, tgt, pred, label)

    return out[0, :N], out[1, :N]


def masked_multi_output_metric(act_logits, ttne_preds, ttne_labels, act_labels):
    """outputs = (act_logits (B,W,C), ttne_preds (B,W,1))
       labels  = (..., ttne_labels (B,W,1), act_labels (B,W))"""
    ce, ae = _dense_losses(act_logits, ttne_preds, ttne_labels, act_labels)

    # Data-dependent compaction (variable NP) - plain eager JAX, outside the
    # kernel.  Like the PyTorch reference, this assumes both masks select the
    # same number of positions.
    cat_sel = ce[act_labels.reshape(-1) != 0]
    cont_sel = ae[ttne_labels.reshape(-1) != -100.0]
    return cat_sel + cont_sel


def _reference(act_logits, ttne_preds, ttne_labels, act_labels):
    B, W, C = act_logits.shape
    logits = act_logits.reshape(-1, C).astype(jnp.float32)
    tgt = act_labels.reshape(-1)
    lse = jax.scipy.special.logsumexp(logits, axis=-1)
    ce = lse - jnp.take_along_axis(logits, tgt[:, None], axis=-1)[:, 0]
    ce = jnp.where(tgt == 0, 0.0, ce)
    ae = jnp.abs(ttne_preds.reshape(-1) - ttne_labels.reshape(-1))
    return ce[tgt != 0] + ae[ttne_labels.reshape(-1) != -100.0]


if __name__ == "__main__":
    key = jax.random.PRNGKey(0)
    B, W, C = 2, 8, 12          # batch, window (suffix length), num_classes

    k1, k2, k3, k4 = jax.random.split(key, 4)
    act_logits = jax.random.normal(k1, (B, W, C), dtype=jnp.float32)
    ttne_preds = jax.random.normal(k2, (B, W, 1), dtype=jnp.float32)

    # Per-sequence valid lengths; padded positions: act label 0, ttne label -100.
    lengths = jnp.array([6, 4], dtype=jnp.int32)
    pos = jnp.arange(W)[None, :]
    valid = pos < lengths[:, None]                                    # (B, W)

    act_labels = jax.random.randint(k3, (B, W), 1, C)                 # 1..C-1 valid
    act_labels = jnp.where(valid, act_labels, 0)
    ttne_labels = jnp.abs(jax.random.normal(k4, (B, W, 1), dtype=jnp.float32))
    ttne_labels = jnp.where(valid[..., None], ttne_labels, -100.0)

    out = masked_multi_output_metric(act_logits, ttne_preds, ttne_labels, act_labels)
    out = jax.block_until_ready(out)

    ref = _reference(act_logits, ttne_preds, ttne_labels, act_labels)
    np.testing.assert_allclose(np.asarray(out), np.asarray(ref),
                               rtol=1e-5, atol=1e-5)
    assert out.shape == (int(jnp.sum(valid)),)

    print("KERNEL_OK")
</pallas_src>

<mosaic_0001>
module attributes {stable_mosaic.version = 11 : i64} {
  func.func @_metric_kernel(%arg0: i32, %arg1: memref<12x128xf32, #tpu.memory_space<vmem>>, %arg2: memref<1x128xi32, #tpu.memory_space<vmem>>, %arg3: memref<1x128xf32, #tpu.memory_space<vmem>>, %arg4: memref<1x128xf32, #tpu.memory_space<vmem>>, %arg5: memref<2x128xf32, #tpu.memory_space<vmem>>) attributes {dimension_semantics = [#tpu.dimension_semantics<parallel>], iteration_bounds = array<i64: 1>, scalar_prefetch = 0 : i64, scratch_operands = 0 : i64, tpu.core_type = #tpu.core_type<tc>, window_params = [{transform_indices = @transform_0, window_bounds = array<i64: 12, 128>}, {transform_indices = @transform_1, window_bounds = array<i64: 1, 128>}, {transform_indices = @transform_2, window_bounds = array<i64: 1, 128>}, {transform_indices = @transform_3, window_bounds = array<i64: 1, 128>}, {transform_indices = @transform_4, window_bounds = array<i64: 2, 128>}]} {
    %c0 = arith.constant 0 : index
    %c0_0 = arith.constant 0 : index
    %0 = vector.load %arg1[%c0, %c0_0] : memref<12x128xf32, #tpu.memory_space<vmem>>, vector<12x128xf32>
    %c0_1 = arith.constant 0 : index
    %c0_2 = arith.constant 0 : index
    %1 = vector.load %arg2[%c0_1, %c0_2] : memref<1x128xi32, #tpu.memory_space<vmem>>, vector<1x128xi32>
    %cst = arith.constant dense<0xFF800000> : vector<128xf32>
    %2 = vector.multi_reduction <maximumf>, %0, %cst [0] : vector<12x128xf32> to vector<128xf32>
    %3 = vector.shape_cast %2 : vector<128xf32> to vector<1x128xf32>
    %4 = vector.broadcast %3 : vector<1x128xf32> to vector<12x128xf32>
    %5 = arith.subf %0, %4 : vector<12x128xf32>
    %6 = math.exp %5 : vector<12x128xf32>
    %cst_3 = arith.constant dense<0.000000e+00> : vector<128xf32>
    %7 = vector.multi_reduction <add>, %6, %cst_3 [0] : vector<12x128xf32> to vector<128xf32>
    %8 = vector.shape_cast %7 : vector<128xf32> to vector<1x128xf32>
    %9 = math.log %8 : vector<1x128xf32>
    %10 = arith.addf %3, %9 : vector<1x128xf32>
    %11 = tpu.iota {dimensions = array<i32: 0>} : vector<12x128xi32>
    %12 = vector.broadcast %1 : vector<1x128xi32> to vector<12x128xi32>
    %13 = arith.cmpi eq, %11, %12 : vector<12x128xi32>
    %cst_4 = arith.constant 0.000000e+00 : f32
    %14 = vector.broadcast %cst_4 : f32 to vector<12x128xf32>
    %15 = arith.select %13, %0, %14 : vector<12x128xi1>, vector<12x128xf32>
    %cst_5 = arith.constant dense<0.000000e+00> : vector<128xf32>
    %16 = vector.multi_reduction <add>, %15, %cst_5 [0] : vector<12x128xf32> to vector<128xf32>
    %17 = vector.shape_cast %16 : vector<128xf32> to vector<1x128xf32>
    %c0_i32 = arith.constant 0 : i32
    %18 = vector.broadcast %c0_i32 : i32 to vector<1x128xi32>
    %19 = arith.cmpi eq, %1, %18 : vector<1x128xi32>
    %20 = arith.subf %10, %17 : vector<1x128xf32>
    %cst_6 = arith.constant 0.000000e+00 : f32
    %21 = vector.broadcast %cst_6 : f32 to vector<1x128xf32>
    %22 = arith.select %19, %21, %20 : vector<1x128xi1>, vector<1x128xf32>
    %c0_7 = arith.constant 0 : index
    %c0_8 = arith.constant 0 : index
    %23 = vector.load %arg3[%c0_7, %c0_8] : memref<1x128xf32, #tpu.memory_space<vmem>>, vector<1x128xf32>
    %c0_9 = arith.constant 0 : index
    %c0_10 = arith.constant 0 : index
    %24 = vector.load %arg4[%c0_9, %c0_10] : memref<1x128xf32, #tpu.memory_space<vmem>>, vector<1x128xf32>
    %25 = arith.subf %23, %24 : vector<1x128xf32>
    %26 = math.absf %25 : vector<1x128xf32>
    %c0_11 = arith.constant 0 : index
    %c0_12 = arith.constant 0 : index
    %27 = vector.load %arg5[%c0_11, %c0_12] : memref<2x128xf32, #tpu.memory_space<vmem>>, vector<1x128xf32>
    tpu.vector_store %arg5[%c0_11, %c0_12], %22 {strides = array<i32>} : memref<2x128xf32, #tpu.memory_space<vmem>>, vector<1x128xf32>,
    %c1 = arith.constant 1 : index
    %c0_13 = arith.constant 0 : index
    %28 = vector.load %arg5[%c1, %c0_13] : memref<2x128xf32, #tpu.memory_space<vmem>>, vector<1x128xf32>
    tpu.vector_store %arg5[%c1, %c0_13], %26 {strides = array<i32>} : memref<2x128xf32, #tpu.memory_space<vmem>>, vector<1x128xf32>,
    return
  }
  func.func @transform_0(%arg0: i32) -> (i32, i32) {
    %c0_i32 = arith.constant 0 : i32
    %c0_i32_0 = arith.constant 0 : i32
    return %c0_i32, %arg0 : i32, i32
  }
  func.func @transform_1(%arg0: i32) -> (i32, i32) {
    %c0_i32 = arith.constant 0 : i32
    %c0_i32_0 = arith.constant 0 : i32
    return %c0_i32, %arg0 : i32, i32
  }
  func.func @transform_2(%arg0: i32) -> (i32, i32) {
    %c0_i32 = arith.constant 0 : i32
    %c0_i32_0 = arith.constant 0 : i32
    return %c0_i32, %arg0 : i32, i32
  }
  func.func @transform_3(%arg0: i32) -> (i32, i32) {
    %c0_i32 = arith.constant 0 : i32
    %c0_i32_0 = arith.constant 0 : i32
    return %c0_i32, %arg0 : i32, i32
  }
  func.func @transform_4(%arg0: i32) -> (i32, i32) {
    %c0_i32 = arith.constant 0 : i32
    %c0_i32_0 = arith.constant 0 : i32
    return %c0_i32, %arg0 : i32, i32
  }
}

</mosaic_0001>

<llo_original>
// kernel: _dense_losses.1
$region0: #{_dense_losses.1}
  #allocation0 [shape = 'u32[]', space=smem, size = 0x4, offset = 0x4, fixed_abs, tag = 'smem constant byte address 0x4 - core index']
  #allocation1 [shape = 'u32[144,128]{1,0:T(1,128)}', space=vmem, size = 0x12000, scoped, tag = 'internal scratch']
  %s0 = inlined_call_operand.vmem [shape: f32[12,128], index: 0, kind: input, shape index: {}]
  %s1 = inlined_call_operand.vmem [shape: s32[1,128], index: 1, kind: input, shape index: {}]
  %s2 = inlined_call_operand.vmem [shape: f32[1,128], index: 2, kind: input, shape index: {}]
  %s3 = inlined_call_operand.vmem [shape: f32[1,128], index: 3, kind: input, shape index: {}]
  %s4 = inlined_call_operand.vmem [shape: f32[2,128], index: 4, kind: output, shape index: {}]
  %s5 = sld [smem:[#allocation0]]
  $region26: #{_dense_losses.1} parent=0
    _
  %s7 = ssub.s32 1, %s5
  %s8 = scalar_select 0, %s7, %s5
  // Predicated region
  $region2: #{_dense_losses.1} parent=0 // pred_check
    _
  $region3: #{_dense_losses.1} parent=0 // pred_check_branch
    %10 = sbr.rel (0) target = $region5
  $region4: #{_dense_losses.1} parent=0 // pred_region
    _
  $region5: #{_dense_losses.1} parent=0 // pred_fallthru
    _
  // Predicated region
  $region6: #{_dense_losses.1} parent=0 // pred_check
    _
  $region7: #{_dense_losses.1} parent=0 // pred_check_branch
    %12 = sbr.rel (0) target = $region9
  $region8: #{_dense_losses.1} parent=0 // pred_region
    _
  $region9: #{_dense_losses.1} parent=0 // pred_fallthru
    _
  // Predicated region
  $region10: #{_dense_losses.1} parent=0 // pred_check
    _
  $region11: #{_dense_losses.1} parent=0 // pred_check_branch
    %14 = sbr.rel (0) target = $region13
  $region12: #{_dense_losses.1} parent=0 // pred_region
    _
  $region13: #{_dense_losses.1} parent=0 // pred_fallthru
    _
  // Predicated region
  $region14: #{_dense_losses.1} parent=0 // pred_check
    _
  $region15: #{_dense_losses.1} parent=0 // pred_check_branch
    %16 = sbr.rel (0) target = $region17
  $region16: #{_dense_losses.1} parent=0 // pred_region
    _
  $region17: #{_dense_losses.1} parent=0 // pred_fallthru
    _
  %v17 = vld [vmem:[%s0] sm:$0xff]
  %v18 = vld [vmem:[%s0 + $0x8] sm:$0xf]
  %v19 = vld [vmem:[%s1] sm:$0x1]
  %vm20 = vcmask 1043456
  %v21 = vsel %vm20, %v18, -inf
  %v22 = vmax.f32 %v17, %v21
  %v23 = vrot.slane %v22, 4
  %v24 = vmax.f32 %v22, %v23
  %v25 = vrot.slane %v24, 2
  %v26 = vmax.f32 %v24, %v25
  %v27 = vrot.slane %v26, 1
  %v28 = vmax.f32 %v26, %v27
  %v29 = vsub.f32 %v17, %v28
  %v30 = vsub.f32 %v18, %v28
  %v31 = vmul.f32 %v29, 1.442695
  %v32 = vpow.pop %v31
  %v33 = vmul.f32 %v30, 1.442695
  %v34 = vpow.pop %v33
  %v35 = vsel %vm20, %v34, 0.0
  %v36 = vadd.f32 %v32, %v35
  %v37 = vrot.slane %v36, 4
  %v38 = vadd.f32 %v36, %v37
  %v39 = vrot.slane %v38, 2
  %v40 = vadd.f32 %v38, %v39
  %v41 = vrot.slane %v40, 1
  %v42 = vadd.f32 %v40, %v41
  %v43 = vlog2.pop %v42
  %v44 = vmul.f32 %v43, 0.6931472
  %v45 = vadd.f32 %v28, %v44
  %v46 = vlaneseq
  %v47 = vshrl.u32 %v46, 7
  %v48 = vadd.s32 %v47, 8
  %v49 = vlaneseq
  %v50 = vshrl.u32 %v49, 7
  %v51 = vsub.s32 0, %v50
  %v52 = vrot.slane %v19, %v51
  %vm53 = vcmp.eq.s32.totalorder %v47, %v52
  %vm54 = vcmp.eq.s32.totalorder %v48, %v52
  %v55 = vsel %vm53, %v17, 0.0
  %v56 = vsel %vm54, %v18, 0.0
  %v57 = vsel %vm20, %v56, 0.0
  %v58 = vadd.f32 %v55, %v57
  %v59 = vrot.slane %v58, 4
  %v60 = vadd.f32 %v58, %v59
  %v61 = vrot.slane %v60, 2
  %v62 = vadd.f32 %v60, %v61
  %v63 = vrot.slane %v62, 1
  %v64 = vadd.f32 %v62, %v63
  %vm65 = vcmp.eq.s32.totalorder %v19, 0
  %v66 = vsub.f32 %v45, %v64
  %v67 = vsel %vm65, 0.0, %v66
  %v68 = vld [vmem:[%s2] sm:$0x1]
  %v69 = vld [vmem:[%s3] sm:$0x1]
  %v70 = vsub.f32 %v68, %v69
  %v71 = vand.u32 2147483647, %v70
  %72 = vst [vmem:[%s4] sm:$0x1] %v67
  %73 = vst [vmem:[%s4 + $0x1] sm:$0x1] %v71
  // Predicated region
  $region18: #{_dense_losses.1} parent=0 // pred_check
    _
  $region19: #{_dense_losses.1} parent=0 // pred_check_branch
    %75 = sbr.rel (0) target = $region21
  $region20: #{_dense_losses.1} parent=0 // pred_region
    _
  $region21: #{_dense_losses.1} parent=0 // pred_fallthru
    _
  // Predicated region
  $region22: #{_dense_losses.1} parent=0 // pred_check
    _
  $region23: #{_dense_losses.1} parent=0 // pred_check_branch
    %77 = sbr.rel (0) target = $region25
  $region24: #{_dense_losses.1} parent=0 // pred_region
    _
  $region25: #{_dense_losses.1} parent=0 // pred_fallthru
    _

</llo_original>
